<compile_context>
chip_gen: v7x
topology: tpu7x:2x2x1
jax: 0.10.0
libtpu: 0.0.40
codegen_flags: <defaults>
</compile_context>

<pallas_src>
import functools

import jax
import jax.numpy as jnp
from jax.experimental import pallas as pl
from jax.experimental.pallas import tpu as pltpu


def _round_up(x, m):
    return (x + m - 1) // m * m


def _gated_cnn_kernel(x_ref, w_ref, out_ref, *, kernel_size, seq_tile, hidden):
    """One group of G halo windows per grid step.

    x_ref:   (G, seq_tile + 2*pad, hidden)   bf16 halo windows
    w_ref:   (kernel_size*hidden, 2*hidden)  bf16 fused [conv | gate] weights
    out_ref: (G, seq_tile, hidden)           output dtype = input dtype
    """
    g = x_ref.shape[0]
    m = g * seq_tile  # matmul M dim (batch folded into rows)

    if hidden >= 128:
        # Per-tap accumulated matmuls: contraction depth = hidden (>= 128),
        # no im2col slab / lane concat materialized.
        acc = jnp.dot(x_ref[:, 0:seq_tile, :].reshape(m, hidden),
                      w_ref[0:hidden, :],
                      preferred_element_type=jnp.float32)
        for t in range(1, kernel_size):
            tap = x_ref[:, t:t + seq_tile, :].reshape(m, hidden)
            acc = acc + jnp.dot(tap, w_ref[t * hidden:(t + 1) * hidden, :],
                                preferred_element_type=jnp.float32)
    else:
        # Small hidden: fold the k taps into the contraction dim so the MXU
        # sees K = k*hidden instead of k shallow K = hidden matmuls.
        taps = [x_ref[:, t:t + seq_tile, :].reshape(m, hidden)
                for t in range(kernel_size)]
        slab = jnp.concatenate(taps, axis=1) if kernel_size > 1 else taps[0]
        acc = jnp.dot(slab, w_ref[...], preferred_element_type=jnp.float32)

    a = acc[:, :hidden]
    b = acc[:, hidden:]
    y = a * jax.nn.sigmoid(b)                         # (m, hidden) f32
    out_ref[...] = y.reshape(out_ref.shape).astype(out_ref.dtype)


@functools.partial(jax.jit, static_argnames=("kernel_size", "seq_tile"))
def gated_cnn(x, w_cnn, w_gate, *, kernel_size, seq_tile=None):
    """x: (batch, seq, hidden); w_*: (kernel_size, hidden_in, hidden_out)."""
    batch, seq, hidden = x.shape
    if kernel_size % 2 != 1:
        # Even k would change the output length in the reference PyTorch
        # module; reject it explicitly.
        raise ValueError("gated_cnn only supports odd kernel_size "
                         "(PyTorch 'same'-length padding).")
    pad = (kernel_size - 1) // 2

    # ---------------- tiling (tail handled by host-side zero pad) ----------
    if seq_tile is None:
        seq_tile = 512 if seq > 512 else _round_up(seq, 8)
    seq_tile = _round_up(int(seq_tile), 8)
    num_tiles = pl.cdiv(seq, seq_tile)
    seq_pad = num_tiles * seq_tile              # padded sequence length
    n_win = batch * num_tiles                   # total halo windows
    win_len = seq_tile + 2 * pad

    # Windows per grid step: fold batch/tiles into the matmul M dim so small
    # configs still feed the MXU with a reasonable M (cap M at 512 rows).
    max_rows = 512
    g = 1
    for cand in range(min(n_win, max(1, max_rows // seq_tile)), 0, -1):
        if n_win % cand == 0:
            g = cand
            break

    # ------------- host-side prep: bf16 + one pad pass + halo windows ------
    xb = x.astype(jnp.bfloat16)                 # halves DMA + VMEM residency
    x_padded = jnp.pad(xb, ((0, 0), (pad, pad + seq_pad - seq), (0, 0)))
    if num_tiles == 1:
        x_win = x_padded.reshape(batch, 1, win_len, hidden)
    else:
        idx = (jnp.arange(num_tiles)[:, None] * seq_tile
               + jnp.arange(win_len)[None, :])          # (num_tiles, win_len)
        x_win = x_padded[:, idx, :]                     # (B, nt, win_len, H)
    x_win = x_win.reshape(n_win, win_len, hidden)

    # Fused [conv | gate] weights: output dims concatenated (N = 2H), taps
    # folded into the contraction dim, stored bf16.
    w_fused = jnp.concatenate([w_cnn, w_gate], axis=-1)            # (k, H, 2H)
    w_fused = w_fused.reshape(kernel_size * hidden, 2 * hidden)
    w_fused = w_fused.astype(jnp.bfloat16)

    kernel = functools.partial(_gated_cnn_kernel, kernel_size=kernel_size,
                               seq_tile=seq_tile, hidden=hidden)

    out = pl.pallas_call(
        kernel,
        out_shape=jax.ShapeDtypeStruct((n_win, seq_tile, hidden), x.dtype),
        grid_spec=pltpu.PrefetchScalarGridSpec(
            num_scalar_prefetch=0,
            grid=(n_win // g,),
            in_specs=[
                # G halo windows per step: VMEM scales with seq_tile, not seq.
                pl.BlockSpec((g, win_len, hidden), lambda i: (i, 0, 0)),
                # Fused weights: constant block index -> effectively resident.
                pl.BlockSpec((kernel_size * hidden, 2 * hidden),
                             lambda i: (0, 0)),
            ],
            out_specs=pl.BlockSpec((g, seq_tile, hidden), lambda i: (i, 0, 0)),
        ),
        compiler_params=pltpu.CompilerParams(
            dimension_semantics=("parallel",)),
    )(x_win, w_fused)

    out = out.reshape(batch, seq_pad, hidden)
    return out[:, :seq, :]


def gated_cnn_reference(x, w_cnn, w_gate, *, kernel_size):
    """Pure-JAX f32 reference of the PyTorch forward."""
    pad = (kernel_size - 1) // 2
    seq = x.shape[1]
    x_pad = jnp.pad(x, ((0, 0), (pad, pad), (0, 0)))

    def conv(w):
        out = jnp.zeros(x.shape[:2] + (w.shape[-1],), jnp.float32)
        for t in range(kernel_size):
            out = out + jnp.einsum("bsh,ho->bso", x_pad[:, t:t + seq, :], w[t],
                                   precision="highest")
        return out

    a = conv(w_cnn)
    b = conv(w_gate)
    return (a * jax.nn.sigmoid(b)).astype(x.dtype)


if __name__ == "__main__":
    # config: hidden_size=32, kernel_size=3 -> Conv1d(32, 32, 3, pad=1, no bias)
    batch, seq, hidden, ksize = 2, 8, 32, 3

    key = jax.random.PRNGKey(0)
    kx, ka, kb = jax.random.split(key, 3)

    x = jax.random.normal(kx, (batch, seq, hidden), dtype=jnp.float32)
    # PyTorch conv weight is (out, in, k); stored here as (k, in, out).
    w_cnn = jax.random.normal(ka, (ksize, hidden, hidden), jnp.float32) * 0.1
    w_gate = jax.random.normal(kb, (ksize, hidden, hidden), jnp.float32) * 0.1

    out = gated_cnn(x, w_cnn, w_gate, kernel_size=ksize)
    out = jax.block_until_ready(out)

    ref = gated_cnn_reference(x, w_cnn, w_gate, kernel_size=ksize)
    assert out.shape == (batch, seq, hidden)
    # bf16 matmul operands with f32 accumulation -> loose-but-meaningful tol.
    assert jnp.allclose(out, ref, atol=3e-2, rtol=3e-2), (
        "mismatch vs reference, max abs err = "
        f"{float(jnp.max(jnp.abs(out - ref)))}")

    print("KERNEL_OK")
</pallas_src>

<mosaic_0001>
module attributes {stable_mosaic.version = 11 : i64} {
  func.func @_gated_cnn_kernel(%arg0: i32, %arg1: memref<2x10x32xbf16, #tpu.memory_space<vmem>>, %arg2: memref<96x64xbf16, #tpu.memory_space<vmem>>, %arg3: memref<2x8x32xf32, #tpu.memory_space<vmem>>) attributes {dimension_semantics = [#tpu.dimension_semantics<parallel>], iteration_bounds = array<i64: 1>, scalar_prefetch = 0 : i64, scratch_operands = 0 : i64, tpu.core_type = #tpu.core_type<tc>, window_params = [{transform_indices = @transform_0, window_bounds = array<i64: 2, 10, 32>}, {pipeline_mode = #tpu.pipeline_mode<synchronous>, transform_indices = @transform_1, window_bounds = array<i64: 96, 64>}, {transform_indices = @transform_2, window_bounds = array<i64: 2, 8, 32>}]} {
    %c0 = arith.constant 0 : index
    %c0_0 = arith.constant 0 : index
    %c0_1 = arith.constant 0 : index
    %0 = vector.load %arg1[%c0, %c0_0, %c0_1] : memref<2x10x32xbf16, #tpu.memory_space<vmem>>, vector<2x8x32xbf16>
    %1 = vector.shape_cast %0 : vector<2x8x32xbf16> to vector<16x32xbf16>
    %c0_2 = arith.constant 0 : index
    %c1 = arith.constant 1 : index
    %c0_3 = arith.constant 0 : index
    %2 = vector.load %arg1[%c0_2, %c1, %c0_3] : memref<2x10x32xbf16, #tpu.memory_space<vmem>>, vector<2x8x32xbf16>
    %3 = vector.shape_cast %2 : vector<2x8x32xbf16> to vector<16x32xbf16>
    %c0_4 = arith.constant 0 : index
    %c2 = arith.constant 2 : index
    %c0_5 = arith.constant 0 : index
    %4 = vector.load %arg1[%c0_4, %c2, %c0_5] : memref<2x10x32xbf16, #tpu.memory_space<vmem>>, vector<2x8x32xbf16>
    %5 = vector.shape_cast %4 : vector<2x8x32xbf16> to vector<16x32xbf16>
    %6 = tpu.concatenate %1, %3, %5 in 1 : vector<16x32xbf16>, vector<16x32xbf16>, vector<16x32xbf16> -> vector<16x96xbf16>
    %c0_6 = arith.constant 0 : index
    %c0_7 = arith.constant 0 : index
    %7 = vector.load %arg2[%c0_6, %c0_7] : memref<96x64xbf16, #tpu.memory_space<vmem>>, vector<96x64xbf16>
    %cst = arith.constant dense<0.000000e+00> : vector<16x64xf32>
    %8 = tpu.matmul %6, %7, %cst {dimension_numbers = #tpu.dot_dimension_numbers<[1], [0], [0], [1], [0, 0, 1, 1], [], []>} : vector<16x96xbf16>, vector<96x64xbf16>, vector<16x64xf32> -> vector<16x64xf32>
    %9 = vector.extract_strided_slice %8 {offsets = [0, 0], sizes = [16, 32], strides = [1, 1]} : vector<16x64xf32> to vector<16x32xf32>
    %10 = vector.extract_strided_slice %8 {offsets = [0, 32], sizes = [16, 32], strides = [1, 1]} : vector<16x64xf32> to vector<16x32xf32>
    %11 = arith.negf %10 : vector<16x32xf32>
    %12 = math.exp %11 : vector<16x32xf32>
    %cst_8 = arith.constant 1.000000e+00 : f32
    %13 = vector.broadcast %cst_8 : f32 to vector<16x32xf32>
    %14 = arith.addf %13, %12 : vector<16x32xf32>
    %15 = arith.divf %13, %14 : vector<16x32xf32>
    %16 = arith.mulf %9, %15 : vector<16x32xf32>
    %17 = vector.shape_cast %16 : vector<16x32xf32> to vector<2x8x32xf32>
    %c0_9 = arith.constant 0 : index
    %c0_10 = arith.constant 0 : index
    %c0_11 = arith.constant 0 : index
    %18 = vector.load %arg3[%c0_9, %c0_10, %c0_11] : memref<2x8x32xf32, #tpu.memory_space<vmem>>, vector<2x8x32xf32>
    tpu.vector_store %arg3[%c0_9, %c0_10, %c0_11], %17 {strides = array<i32>} : memref<2x8x32xf32, #tpu.memory_space<vmem>>, vector<2x8x32xf32>,
    return
  }
  func.func @transform_0(%arg0: i32) -> (i32, i32, i32) {
    %c0_i32 = arith.constant 0 : i32
    %c0_i32_0 = arith.constant 0 : i32
    %c0_i32_1 = arith.constant 0 : i32
    return %arg0, %c0_i32, %c0_i32_0 : i32, i32, i32
  }
  func.func @transform_1(%arg0: i32) -> (i32, i32) {
    %c0_i32 = arith.constant 0 : i32
    %c0_i32_0 = arith.constant 0 : i32
    %c0_i32_1 = arith.constant 0 : i32
    return %c0_i32, %c0_i32_0 : i32, i32
  }
  func.func @transform_2(%arg0: i32) -> (i32, i32, i32) {
    %c0_i32 = arith.constant 0 : i32
    %c0_i32_0 = arith.constant 0 : i32
    %c0_i32_1 = arith.constant 0 : i32
    return %arg0, %c0_i32, %c0_i32_0 : i32, i32, i32
  }
}

</mosaic_0001>

<llo_original>
// kernel: gated_cnn.1
$region0: #{gated_cnn.1}
  #allocation0 [shape = 'u32[]', space=smem, size = 0x4, offset = 0x4, fixed_abs, tag = 'smem constant byte address 0x4 - core index']
  #allocation1 [shape = 'u32[144,128]{1,0:T(1,128)}', space=vmem, size = 0x12000, scoped, tag = 'internal scratch']
  %s0 = inlined_call_operand.vmem [shape: bf16[2,10,32], index: 0, kind: input, shape index: {}]
  %s1 = inlined_call_operand.vmem [shape: bf16[96,64], index: 1, kind: input, shape index: {}]
  %s2 = inlined_call_operand.hbm [shape: f32[2,8,32], index: 2, kind: output, shape index: {}]
  %s3 = sld [smem:[#allocation0]]
  $region18: #{gated_cnn.1} parent=0
    _
  %s5 = ssub.s32 1, %s3
  %s6 = scalar_select 0, %s5, %s3
  $region1: #{gated_cnn.1} parent=0
    #allocation2 [shape = 'u8[8192]{0}', space=vmem, size = 0x2000, scoped, tag = 'output window, operand 0, single buffered']
    #allocation3 [shape = 's32[1]{0}', space=sflag, size = 0x4, scoped, tag = 'scoped memory for gated_cnn.1']
    %7 = vsyncpa [#allocation3], 0
    // Predicated region
    $region2: #{gated_cnn.1} parent=1 // pred_check
      _
    $region3: #{gated_cnn.1} parent=1 // pred_check_branch
      %9 = sbr.rel (0) target = $region5
    $region4: #{gated_cnn.1} parent=1 // pred_region
      _
    $region5: #{gated_cnn.1} parent=1 // pred_fallthru
      _
    // Predicated region
    $region6: #{gated_cnn.1} parent=1 // pred_check
      _
    $region7: #{gated_cnn.1} parent=1 // pred_check_branch
      %11 = sbr.rel (0) target = $region9
    $region8: #{gated_cnn.1} parent=1 // pred_region
      _
    $region9: #{gated_cnn.1} parent=1 // pred_fallthru
      _
    %v13 = vld [vmem:[%s0] sm:$0xf]
    %v14 = vld [vmem:[%s0 + $0x8] sm:$0xf]
    %v15 = vld [vmem:[%s0 + $0x4] sm:$0x1]
    %v16 = vld [vmem:[%s0 + $0xc] sm:$0x1]
    %vm17 = vsmask.f32 3328
    %vm18 = vsmask.f32 7440
    %vm19 = vmor %vm17, %vm18
    %v21 = vshrl.u32 %v13, 16
    %v23 = vrot.slane %v21, 4
    %v24 = vshll.u32 %v13, 16
    %v26 = vrot.slane %v24, 5
    %v27 = vor.u32 %v23, %v26
    %v28 = vrot.slane %v27, 4
    %v30 = vshll.u32 %v15, 16
    %v32 = vrot.slane %v30, 5
    %v33 = vsel %vm19, %v28, %v32
    %v35 = vshrl.u32 %v14, 16
    %v37 = vrot.slane %v35, 4
    %v38 = vshll.u32 %v14, 16
    %v40 = vrot.slane %v38, 5
    %v41 = vor.u32 %v37, %v40
    %v42 = vrot.slane %v41, 4
    %v44 = vshll.u32 %v16, 16
    %v46 = vrot.slane %v44, 5
    %v47 = vsel %vm19, %v42, %v46
    %v48 = vld [vmem:[%s0] sm:$0xe]
    %v49 = vld [vmem:[%s0 + $0x8] sm:$0xe]
    %vm54 = vcmask 1042432
    %vm55 = vcmask 1046532
    %vm56 = vmor %vm54, %vm55
    %v57 = vrot.slane %v48, 5
    %v58 = vrot.slane %v57, 4
    %v59 = vrot.slane %v15, 5
    %v60 = vsel %vm56, %v58, %v59
    %v61 = vrot.slane %v49, 5
    %v62 = vrot.slane %v61, 4
    %v63 = vrot.slane %v16, 5
    %v64 = vsel %vm56, %v62, %v63
    %v67 = vunpack.c.l.b16 %v13
    %v68 = vunpack.c.l.b16 %v14
    %v69 = vpack.c.b16 %v68, %v67
    %v70 = vunpack.c.l.b16 %v33
    %v71 = vunpack.c.l.b16 %v47
    %v72 = vpack.c.b16 %v71, %v70
    %73 = vrot.lane.b32.xlu0 %v72, 32
    %v74 = vpop.permute.xlu0 %73
    %v75 = vunpack.c.l.b16 %v60
    %v76 = vunpack.c.l.b16 %v64
    %v77 = vpack.c.b16 %v76, %v75
    %78 = vrot.lane.b32.xlu0 %v77, 64
    %v79 = vpop.permute.xlu0 %78
    %vm80 = vcmask 261120
    %v83 = vsel %vm80, %v69, %v74
    %vm84 = vcmask 523264
    %v86 = vsel %vm84, %v83, %v79
    %v87 = vld [vmem:[%s1] sm:$0xf]
    %v88 = vld [vmem:[%s1 + $0x4] sm:$0xf]
    %v89 = vld [vmem:[%s1 + $0x8] sm:$0xf]
    %v90 = vld [vmem:[%s1 + $0xc] sm:$0xf]
    %v91 = vld [vmem:[%s1 + $0x10] sm:$0xf]
    %v92 = vld [vmem:[%s1 + $0x14] sm:$0xf]
    %v93 = vld [vmem:[%s1 + $0x18] sm:$0xf]
    %v94 = vld [vmem:[%s1 + $0x1c] sm:$0xf]
    %v95 = vld [vmem:[%s1 + $0x20] sm:$0xf]
    %v96 = vld [vmem:[%s1 + $0x24] sm:$0xf]
    %v97 = vld [vmem:[%s1 + $0x28] sm:$0xf]
    %v98 = vld [vmem:[%s1 + $0x2c] sm:$0xf]
    %v111 = vunpack.c.l.b16 %v87
    %v112 = vunpack.c.l.b16 %v88
    %v113 = vunpack.c.l.b16 %v89
    %v114 = vunpack.c.l.b16 %v90
    %v115 = vunpack.c.l.b16 %v91
    %v116 = vunpack.c.l.b16 %v92
    %v117 = vunpack.c.l.b16 %v93
    %v118 = vunpack.c.l.b16 %v94
    %v119 = vunpack.c.l.b16 %v95
    %v120 = vunpack.c.l.b16 %v96
    %v121 = vunpack.c.l.b16 %v97
    %v122 = vunpack.c.l.b16 %v98
    %v123 = vpack.c.b16 %v112, %v111
    %v124 = vpack.c.b16 %v114, %v113
    %v125 = vpack.c.b16 %v116, %v115
    %v126 = vpack.c.b16 %v118, %v117
    %v127 = vpack.c.b16 %v120, %v119
    %v128 = vpack.c.b16 %v122, %v121
    %vm135 = vcmask 785408
    %v136 = vsel %vm135, %v86, 0
    %138 = vmatprep.subr.bf16.mxu0 0
    %139 = vmatpush1.bf16.msra.mxu0 %v123
    %140 = vmatprep.subr.bf16.mxu0 0
    %141 = vmatpush1.bf16.msra.mxu0 %v124
    %142 = vmatprep.subr.bf16.mxu0 0
    %143 = vmatpush1.bf16.msra.mxu0 %v125
    %144 = vmatprep.subr.bf16.mxu0 0
    %145 = vmatpush1.bf16.msra.mxu0 %v126
    %146 = vmatprep.subr.bf16.mxu0 0
    %147 = vmatpush1.bf16.msra.mxu0 %v127
    %148 = vmatprep.subr.bf16.mxu0 0
    %149 = vmatpush1.bf16.msra.mxu0 %v128
    %150 = vmatprep.subr.bf16.mxu0 0
    %151 = vmatpush1.bf16.msra.mxu0 0
    %152 = vmatprep.subr.bf16.mxu0 0
    %153 = vmatpush1.bf16.msra.mxu0 0
    %154 = vmatprep.subr.bf16.mxu0 0
    %155 = vmatpush1.bf16.msra.mxu0 0
    %156 = vmatprep.subr.bf16.mxu0 0
    %157 = vmatpush1.bf16.msra.mxu0 0
    %158 = vmatprep.subr.bf16.mxu0 0
    %159 = vmatpush1.bf16.msra.mxu0 0
    %160 = vmatprep.subr.bf16.mxu0 0
    %161 = vmatpush1.bf16.msra.mxu0 0
    %162 = vmatprep.subr.bf16.mxu0 0
    %163 = vmatpush1.bf16.msra.mxu0 0
    %164 = vmatprep.subr.bf16.mxu0 0
    %165 = vmatpush1.bf16.msra.mxu0 0
    %166 = vmatprep.subr.bf16.mxu0 0
    %167 = vmatpush1.bf16.msra.mxu0 0
    %168 = vmatprep.subr.bf16.mxu0 0
    %169 = vmatpush1.bf16.msra.mxu0 0
    %170 = vmatprep.mubr.bf16.mxu0 0
    %171 = vmatmul.mubr.bf16.gmra.mrb[0].mxu0 %v136
    %v172 = vpop.f32.mrb[0].mxu0
    %v173 = vadd.f32 0.0, %v172
    %v174 = vpop.f32.mrb[0].mxu0
    %v175 = vpop.f32.mrb[0].mxu0
    %v176 = vadd.f32 0.0, %v175
    %v177 = vpop.f32.mrb[0].mxu0
    %178 = vdwg.mxu0
    %v179 = vxor.u32 %v173, 2147483648
    %v180 = vxor.u32 %v176, 2147483648
    %v181 = vmul.f32 %v179, 1.442695
    %v182 = vpow.pop %v181
    %v183 = vmul.f32 %v180, 1.442695
    %v184 = vpow.pop %v183
    %v185 = vadd.f32 %v182, 1.0
    %v186 = vadd.f32 %v184, 1.0
    %v187 = vrcp.pop %v185
    %v188 = vmul.f32 1.0, %v187
    %v189 = vrcp.pop %v186
    %v190 = vmul.f32 1.0, %v189
    %193 = vrot.lane.b32.xlu0 %v188, 96
    %v194 = vpop.permute.xlu0 %193
    %195 = vrot.lane.b32.xlu0 %v190, 96
    %v196 = vpop.permute.xlu0 %195
    %v199 = vmul.f32 %v173, %v194
    %v200 = vmul.f32 %v176, %v196
    %201 = vst.msk [vmem:[#allocation2] sm:$0xff] %vm80, %v199
    %202 = vst.msk [vmem:[#allocation2 + $0x8] sm:$0xff] %vm80, %v200
    // Predicated region
    $region10: #{gated_cnn.1} parent=1 // pred_check
      _
    $region11: #{gated_cnn.1} parent=1 // pred_check_branch
      %204 = sbr.rel (0) target = $region13
    $region12: #{gated_cnn.1} parent=1 // pred_region
      %s206 = ssub.s32 256, 256
      %207 = vsyncadd [#allocation3], %s206
      %s208 = sshll.u32 [#allocation2], 4
      %s209 = int_to_ptr.vmem [resolvable:$true] %s208
      %214 = dma.vmem_to_hbm [thread:$0]  %s209, 256, %s2, [#allocation3], 128, 128, 8
    $region13: #{gated_cnn.1} parent=1 // pred_fallthru
      _
    // Predicated region
    $region14: #{gated_cnn.1} parent=1 // pred_check
      _
    $region15: #{gated_cnn.1} parent=1 // pred_check_branch
      %216 = sbr.rel (0) target = $region17
    $region16: #{gated_cnn.1} parent=1 // pred_region
      %217 = dma.done [#allocation3], 256
    $region17: #{gated_cnn.1} parent=1 // pred_fallthru
      _
    %218 = vsyncpa [#allocation3], 1

</llo_original>
